<compile_context>
chip_gen: v5e
topology: v5e:2x2
jax: 0.10.0
libtpu: 0.0.40
codegen_flags: <defaults>
</compile_context>

<pallas_src>
import functools

import jax
import jax.numpy as jnp
from jax import lax
from jax.experimental import pallas as pl
from jax.experimental.pallas import tpu as pltpu


def _round_up(x: int, m: int) -> int:
    return (x + m - 1) // m * m


# (T, in) x (out, in) -> (T, out): contract the feature axes.
_CONTRACT_FEATURE = (((1,), (1,)), ((), ()))


def qnetwork_kernel(x_ref, w1_ref, b1_ref, w2_ref, b2_ref, w3_ref, b3_ref,
                    o_ref, *, precision):
    """One batch tile, batch-major: x (T, 66) -> q (T, 4).

    Weights are (out, in) (PyTorch layout), biases are (1, out) f32.  MXU
    operands use the weights' dtype (bf16 by default, f32 optional with
    Precision.HIGHEST); accumulation, bias add and ReLU are always f32.
    """
    cdt = w1_ref.dtype
    x = x_ref[...]
    if x.dtype != cdt:           # no-op when the caller already streams x in cdt
        x = x.astype(cdt)

    h1 = lax.dot_general(x, w1_ref[...], _CONTRACT_FEATURE,
                         precision=precision,
                         preferred_element_type=jnp.float32) + b1_ref[...]
    h1 = jnp.maximum(h1, 0.0)                            # (T, 20) f32

    h2 = lax.dot_general(h1.astype(cdt), w2_ref[...], _CONTRACT_FEATURE,
                         precision=precision,
                         preferred_element_type=jnp.float32) + b2_ref[...]
    h2 = jnp.maximum(h2, 0.0)                            # (T, 15) f32

    q = lax.dot_general(h2.astype(cdt), w3_ref[...], _CONTRACT_FEATURE,
                        precision=precision,
                        preferred_element_type=jnp.float32) + b3_ref[...]
    o_ref[...] = q.astype(o_ref.dtype)                   # (T, 4), PyTorch layout


def _as_weight(w, cdt):
    return w if w.dtype == cdt else w.astype(cdt)


def _as_bias(b):
    b = b.reshape(1, -1)                                 # (1, out), broadcasts over rows
    return b if b.dtype == jnp.float32 else b.astype(jnp.float32)


def prepare_params(params, compute_dtype=jnp.bfloat16):
    """Cast weights/biases into kernel-ready form ONCE (reuse across calls)."""
    cdt = jnp.dtype(compute_dtype)
    out = {}
    for i in (1, 2, 3):
        out[f"w{i}"] = _as_weight(params[f"w{i}"], cdt)
        out[f"b{i}"] = _as_bias(params[f"b{i}"])
    return out


def _pick_tile_n(n, requested, x_itemsize):
    """Batch tile (sublane axis): aligned to the dtype's sublane packing and
    balanced so large batches split into >= 2 roughly-equal tiles (keeps both
    v7x TensorCores busy) with minimal padding."""
    sub = max(8, 32 // max(1, x_itemsize))       # f32 -> 8, bf16 -> 16, int8 -> 32
    requested = max(sub, requested)
    if n <= requested:
        if n >= 2048:                            # enough work to split across 2 TCs
            return _round_up(pl.cdiv(n, 2), sub)
        return _round_up(n, sub)                 # single tile, minimal padding
    num_tiles = pl.cdiv(n, requested)
    return _round_up(pl.cdiv(n, num_tiles), max(sub, 256))


def qnetwork_forward(state, params, *, tile_n=4096, compute_dtype=jnp.bfloat16):
    """QNetwork forward pass (Pallas TPU).

    Args:
      state: (N, input_dim) array, PyTorch layout.  f32 or bf16 -- passing
        bf16 halves the dominant HBM stream on this HBM-bound kernel.
      params: dict with w{1,2,3} of shape (out, in) and b{1,2,3} of shape
        (out,), (out, 1) or (1, out).  Pre-cast with prepare_params() (or call
        under jit) so the per-call astype is free.
      tile_n: target batch rows per grid step.  Sweep 4096-8192; prefer >=8192
        on v7x (3.2 TB/s HBM makes the ~0.35 us per-step overhead bite harder).
      compute_dtype: MXU operand dtype.  bf16 default; float32 gives an exact
        path (dots run with lax.Precision.HIGHEST).

    Returns:
      (N, output_dim) f32 Q-values.
    """
    n, in_dim = state.shape
    out_dim = params["w3"].shape[0]
    cdt = jnp.dtype(compute_dtype)

    w1, b1 = _as_weight(params["w1"], cdt), _as_bias(params["b1"])
    w2, b2 = _as_weight(params["w2"], cdt), _as_bias(params["b2"])
    w3, b3 = _as_weight(params["w3"], cdt), _as_bias(params["b3"])

    tile_n = _pick_tile_n(n, tile_n, state.dtype.itemsize)
    n_pad = _round_up(n, tile_n)
    x = state if n_pad == n else jnp.pad(state, ((0, n_pad - n), (0, 0)))
    grid = (n_pad // tile_n,)

    kernel = functools.partial(
        qnetwork_kernel,
        precision=lax.Precision.HIGHEST if cdt == jnp.dtype(jnp.float32) else None)

    def resident(arr):  # full block at a constant index -> DMA'd once, stays in VMEM
        return pl.BlockSpec(arr.shape, lambda i: (0, 0))

    # Rough VMEM budget: double-buffered x + out blocks plus in-kernel
    # intermediates, all counted as lane-padded (tile_n, 128) f32 slabs.
    slab = tile_n * 128 * 4
    vmem_limit = min(32 * 1024 * 1024 + 6 * slab, 100 * 1024 * 1024)

    out = pl.pallas_call(
        kernel,
        out_shape=jax.ShapeDtypeStruct((n_pad, out_dim), jnp.float32),
        grid=grid,
        in_specs=[
            pl.BlockSpec((tile_n, in_dim), lambda i: (i, 0)),   # contiguous row block
            resident(w1), resident(b1),
            resident(w2), resident(b2),
            resident(w3), resident(b3),
        ],
        out_specs=pl.BlockSpec((tile_n, out_dim), lambda i: (i, 0)),
        compiler_params=pltpu.CompilerParams(
            dimension_semantics=("parallel",),   # batch tiles shard over v7x's 2 TCs
            vmem_limit_bytes=vmem_limit,
        ),
    )(x, w1, b1, w2, b2, w3, b3)

    # Padded rows hold garbage Q's -- anyone removing this slice must mask instead.
    return out[:n]


def init_params(key, input_dim=66, output_dim=4, hidden_dim_1=20, hidden_dim_2=15):
    """torch.nn.Linear-style init: W (out, in), b (out,), U(-1/sqrt(fan_in), +)."""
    ks = jax.random.split(key, 6)

    def linear(kw, kb, fan_in, fan_out):
        bound = 1.0 / jnp.sqrt(jnp.float32(fan_in))
        w = jax.random.uniform(kw, (fan_out, fan_in), jnp.float32, -bound, bound)
        b = jax.random.uniform(kb, (fan_out,), jnp.float32, -bound, bound)
        return w, b

    w1, b1 = linear(ks[0], ks[1], input_dim, hidden_dim_1)
    w2, b2 = linear(ks[2], ks[3], hidden_dim_1, hidden_dim_2)
    w3, b3 = linear(ks[4], ks[5], hidden_dim_2, output_dim)
    return {"w1": w1, "b1": b1, "w2": w2, "b2": b2, "w3": w3, "b3": b3}


def qnetwork_reference(state, p):
    """Pure-JAX f32 reference with PyTorch semantics (x @ W.T + b)."""
    h1 = jnp.maximum(state @ p["w1"].T + p["b1"].reshape(-1), 0.0)
    h2 = jnp.maximum(h1 @ p["w2"].T + p["b2"].reshape(-1), 0.0)
    return h2 @ p["w3"].T + p["b3"].reshape(-1)


if __name__ == "__main__":
    key = jax.random.PRNGKey(0)
    k_params, k_state = jax.random.split(key)

    batch, input_dim = 8, 66
    params = init_params(k_params, input_dim=input_dim, output_dim=4,
                         hidden_dim_1=20, hidden_dim_2=15)
    state = jax.random.normal(k_state, (batch, input_dim), jnp.float32)

    q_ref = qnetwork_reference(state, params)

    # Exact-semantics path: f32 MXU operands at Precision.HIGHEST.
    q_f32 = jax.block_until_ready(
        qnetwork_forward(state, params, compute_dtype=jnp.float32))
    assert q_f32.shape == (batch, 4)
    assert jnp.allclose(q_f32, q_ref, atol=1e-5, rtol=1e-5), "f32 path mismatch"

    # Optimized default path: bf16 MXU operands (weights pre-cast once), f32 accum.
    fast_params = prepare_params(params, jnp.bfloat16)
    q_bf16 = jax.block_until_ready(qnetwork_forward(state, fast_params))
    assert q_bf16.shape == (batch, 4)
    assert jnp.allclose(q_bf16, q_ref, atol=5e-2, rtol=5e-2), "bf16 path mismatch"

    # Narrow the dominant x HBM stream too: caller stores states in bf16.
    q_bf16_x = jax.block_until_ready(
        qnetwork_forward(state.astype(jnp.bfloat16), fast_params))
    assert q_bf16_x.shape == (batch, 4)
    assert jnp.allclose(q_bf16_x, q_ref, atol=7e-2, rtol=7e-2), "bf16-input path mismatch"

    print("KERNEL_OK")
</pallas_src>

<mosaic_0001>
module attributes {stable_mosaic.version = 11 : i64} {
  func.func @qnetwork_kernel(%arg0: i32, %arg1: memref<8x66xf32, #tpu.memory_space<vmem>>, %arg2: memref<20x66xf32, #tpu.memory_space<vmem>>, %arg3: memref<1x20xf32, #tpu.memory_space<vmem>>, %arg4: memref<15x20xf32, #tpu.memory_space<vmem>>, %arg5: memref<1x15xf32, #tpu.memory_space<vmem>>, %arg6: memref<4x15xf32, #tpu.memory_space<vmem>>, %arg7: memref<1x4xf32, #tpu.memory_space<vmem>>, %arg8: memref<8x4xf32, #tpu.memory_space<vmem>>) attributes {dimension_semantics = [#tpu.dimension_semantics<parallel>], iteration_bounds = array<i64: 1>, scalar_prefetch = 0 : i64, scratch_operands = 0 : i64, tpu.core_type = #tpu.core_type<tc>, window_params = [{transform_indices = @transform_0, window_bounds = array<i64: 8, 66>}, {pipeline_mode = #tpu.pipeline_mode<synchronous>, transform_indices = @transform_1, window_bounds = array<i64: 20, 66>}, {pipeline_mode = #tpu.pipeline_mode<synchronous>, transform_indices = @transform_2, window_bounds = array<i64: 1, 20>}, {pipeline_mode = #tpu.pipeline_mode<synchronous>, transform_indices = @transform_3, window_bounds = array<i64: 15, 20>}, {pipeline_mode = #tpu.pipeline_mode<synchronous>, transform_indices = @transform_4, window_bounds = array<i64: 1, 15>}, {pipeline_mode = #tpu.pipeline_mode<synchronous>, transform_indices = @transform_5, window_bounds = array<i64: 4, 15>}, {pipeline_mode = #tpu.pipeline_mode<synchronous>, transform_indices = @transform_6, window_bounds = array<i64: 1, 4>}, {transform_indices = @transform_7, window_bounds = array<i64: 8, 4>}]} {
    %c0 = arith.constant 0 : index
    %c0_0 = arith.constant 0 : index
    %0 = vector.load %arg1[%c0, %c0_0] : memref<8x66xf32, #tpu.memory_space<vmem>>, vector<8x66xf32>
    %c0_1 = arith.constant 0 : index
    %c0_2 = arith.constant 0 : index
    %1 = vector.load %arg2[%c0_1, %c0_2] : memref<20x66xf32, #tpu.memory_space<vmem>>, vector<20x66xf32>
    %cst = arith.constant dense<0.000000e+00> : vector<8x20xf32>
    %2 = tpu.matmul %0, %1, %cst {dimension_numbers = #tpu.dot_dimension_numbers<[1], [1], [0], [0], [0, 0, 1, 0], [], []>, precision = #tpu.contract_precision<fp32>} : vector<8x66xf32>, vector<20x66xf32>, vector<8x20xf32> -> vector<8x20xf32>
    %c0_3 = arith.constant 0 : index
    %c0_4 = arith.constant 0 : index
    %3 = vector.load %arg3[%c0_3, %c0_4] : memref<1x20xf32, #tpu.memory_space<vmem>>, vector<1x20xf32>
    %4 = vector.broadcast %3 : vector<1x20xf32> to vector<8x20xf32>
    %5 = arith.addf %2, %4 : vector<8x20xf32>
    %cst_5 = arith.constant 0.000000e+00 : f32
    %6 = vector.broadcast %cst_5 : f32 to vector<8x20xf32>
    %7 = arith.maximumf %5, %6 : vector<8x20xf32>
    %c0_6 = arith.constant 0 : index
    %c0_7 = arith.constant 0 : index
    %8 = vector.load %arg4[%c0_6, %c0_7] : memref<15x20xf32, #tpu.memory_space<vmem>>, vector<15x20xf32>
    %cst_8 = arith.constant dense<0.000000e+00> : vector<8x15xf32>
    %9 = tpu.matmul %7, %8, %cst_8 {dimension_numbers = #tpu.dot_dimension_numbers<[1], [1], [0], [0], [0, 0, 1, 0], [], []>, precision = #tpu.contract_precision<fp32>} : vector<8x20xf32>, vector<15x20xf32>, vector<8x15xf32> -> vector<8x15xf32>
    %c0_9 = arith.constant 0 : index
    %c0_10 = arith.constant 0 : index
    %10 = vector.load %arg5[%c0_9, %c0_10] : memref<1x15xf32, #tpu.memory_space<vmem>>, vector<1x15xf32>
    %11 = vector.broadcast %10 : vector<1x15xf32> to vector<8x15xf32>
    %12 = arith.addf %9, %11 : vector<8x15xf32>
    %cst_11 = arith.constant 0.000000e+00 : f32
    %13 = vector.broadcast %cst_11 : f32 to vector<8x15xf32>
    %14 = arith.maximumf %12, %13 : vector<8x15xf32>
    %c0_12 = arith.constant 0 : index
    %c0_13 = arith.constant 0 : index
    %15 = vector.load %arg6[%c0_12, %c0_13] : memref<4x15xf32, #tpu.memory_space<vmem>>, vector<4x15xf32>
    %cst_14 = arith.constant dense<0.000000e+00> : vector<8x4xf32>
    %16 = tpu.matmul %14, %15, %cst_14 {dimension_numbers = #tpu.dot_dimension_numbers<[1], [1], [0], [0], [0, 0, 1, 0], [], []>, precision = #tpu.contract_precision<fp32>} : vector<8x15xf32>, vector<4x15xf32>, vector<8x4xf32> -> vector<8x4xf32>
    %c0_15 = arith.constant 0 : index
    %c0_16 = arith.constant 0 : index
    %17 = vector.load %arg7[%c0_15, %c0_16] : memref<1x4xf32, #tpu.memory_space<vmem>>, vector<1x4xf32>
    %18 = vector.broadcast %17 : vector<1x4xf32> to vector<8x4xf32>
    %19 = arith.addf %16, %18 : vector<8x4xf32>
    %c0_17 = arith.constant 0 : index
    %c0_18 = arith.constant 0 : index
    %20 = vector.load %arg8[%c0_17, %c0_18] : memref<8x4xf32, #tpu.memory_space<vmem>>, vector<8x4xf32>
    tpu.vector_store %arg8[%c0_17, %c0_18], %19 {strides = array<i32>} : memref<8x4xf32, #tpu.memory_space<vmem>>, vector<8x4xf32>,
    return
  }
  func.func @transform_0(%arg0: i32) -> (i32, i32) {
    %c0_i32 = arith.constant 0 : i32
    %c0_i32_0 = arith.constant 0 : i32
    return %arg0, %c0_i32 : i32, i32
  }
  func.func @transform_1(%arg0: i32) -> (i32, i32) {
    %c0_i32 = arith.constant 0 : i32
    %c0_i32_0 = arith.constant 0 : i32
    %c0_i32_1 = arith.constant 0 : i32
    return %c0_i32, %c0_i32_0 : i32, i32
  }
  func.func @transform_2(%arg0: i32) -> (i32, i32) {
    %c0_i32 = arith.constant 0 : i32
    %c0_i32_0 = arith.constant 0 : i32
    %c0_i32_1 = arith.constant 0 : i32
    return %c0_i32, %c0_i32_0 : i32, i32
  }
  func.func @transform_3(%arg0: i32) -> (i32, i32) {
    %c0_i32 = arith.constant 0 : i32
    %c0_i32_0 = arith.constant 0 : i32
    %c0_i32_1 = arith.constant 0 : i32
    return %c0_i32, %c0_i32_0 : i32, i32
  }
  func.func @transform_4(%arg0: i32) -> (i32, i32) {
    %c0_i32 = arith.constant 0 : i32
    %c0_i32_0 = arith.constant 0 : i32
    %c0_i32_1 = arith.constant 0 : i32
    return %c0_i32, %c0_i32_0 : i32, i32
  }
  func.func @transform_5(%arg0: i32) -> (i32, i32) {
    %c0_i32 = arith.constant 0 : i32
    %c0_i32_0 = arith.constant 0 : i32
    %c0_i32_1 = arith.constant 0 : i32
    return %c0_i32, %c0_i32_0 : i32, i32
  }
  func.func @transform_6(%arg0: i32) -> (i32, i32) {
    %c0_i32 = arith.constant 0 : i32
    %c0_i32_0 = arith.constant 0 : i32
    %c0_i32_1 = arith.constant 0 : i32
    return %c0_i32, %c0_i32_0 : i32, i32
  }
  func.func @transform_7(%arg0: i32) -> (i32, i32) {
    %c0_i32 = arith.constant 0 : i32
    %c0_i32_0 = arith.constant 0 : i32
    return %arg0, %c0_i32 : i32, i32
  }
}

</mosaic_0001>

<llo_original>
// kernel: tpu_custom_call.1
$region0: #{tpu_custom_call.1}
  #allocation0 [shape = 'u32[]', space=smem, size = 0x4, offset = 0x4, fixed_abs, tag = 'smem constant byte address 0x4 - core index']
  #allocation1 [shape = 'u32[72,128]{1,0:T(1,128)}', space=vmem, size = 0x9000, scoped, tag = 'internal scratch']
  %s0 = inlined_call_operand.hbm [shape: f32[8,66], index: 0, kind: input, shape index: {}]
  %s1 = inlined_call_operand.hbm [shape: f32[20,66], index: 1, kind: input, shape index: {}]
  %s2 = inlined_call_operand.hbm [shape: f32[1,20], index: 2, kind: input, shape index: {}]
  %s3 = inlined_call_operand.hbm [shape: f32[15,20], index: 3, kind: input, shape index: {}]
  %s4 = inlined_call_operand.hbm [shape: f32[1,15], index: 4, kind: input, shape index: {}]
  %s5 = inlined_call_operand.vmem [shape: f32[4,15], index: 5, kind: input, shape index: {}]
  %s6 = inlined_call_operand.vmem [shape: f32[1,4], index: 6, kind: input, shape index: {}]
  %s7 = inlined_call_operand.vmem [shape: f32[8,4], index: 7, kind: output, shape index: {}]
  %s8 = sld [smem:[#allocation0]]
  $region58: #{tpu_custom_call.1} parent=0
    _
  %s10 = ssub.s32 1, %s8
  %s11 = scalar_select 0, %s10, %s8
  $region1: #{tpu_custom_call.1} parent=0
    #allocation2 [shape = 'u8[4096]{0}', space=vmem, size = 0x1000, scoped, tag = 'input window, operand 0, single buffered']
    #allocation3 [shape = 's32[1]{0}', space=sflag, size = 0x4, scoped, tag = 'scoped memory for tpu_custom_call.1']
    #allocation4 [shape = 'u8[12288]{0}', space=vmem, size = 0x3000, scoped, tag = 'input window, operand 1, single buffered']
    #allocation5 [shape = 's32[1]{0}', space=sflag, size = 0x4, scoped, tag = 'scoped memory for tpu_custom_call.1']
    #allocation6 [shape = 'u8[512]{0}', space=vmem, size = 0x400, scoped, tag = 'input window, operand 2, single buffered']
    #allocation7 [shape = 'u8[8192]{0}', space=vmem, size = 0x2000, scoped, tag = 'input window, operand 3, single buffered']
    #allocation8 [shape = 's32[1]{0}', space=sflag, size = 0x4, scoped, tag = 'scoped memory for tpu_custom_call.1']
    #allocation9 [shape = 'u8[512]{0}', space=vmem, size = 0x400, scoped, tag = 'input window, operand 4, single buffered']
    %12 = vsyncpa [#allocation3], 0
    %13 = vsyncpa [#allocation5], 0
    %14 = vsyncpa [#allocation8], 0
    // Predicated region
    $region2: #{tpu_custom_call.1} parent=1 // pred_check
      _
    $region3: #{tpu_custom_call.1} parent=1 // pred_check_branch
      %16 = sbr.rel (0) target = $region5
    $region4: #{tpu_custom_call.1} parent=1 // pred_region
      %18 = vsyncadd [#allocation3], 0
      %s20 = sshll.u32 %s0, 4
      %s21 = int_to_ptr.hbm [resolvable:$true] %s20
      %s22 = sshll.u32 [#allocation2], 4
      %s23 = int_to_ptr.vmem [resolvable:$true] %s22
      %25 = dma.hbm_to_vmem [thread:$0]  %s21, 128, %s23, [#allocation3]
    $region5: #{tpu_custom_call.1} parent=1 // pred_fallthru
      _
    // Predicated region
    $region6: #{tpu_custom_call.1} parent=1 // pred_check
      _
    $region7: #{tpu_custom_call.1} parent=1 // pred_check_branch
      %27 = sbr.rel (0) target = $region9
    $region8: #{tpu_custom_call.1} parent=1 // pred_region
      %29 = vsyncadd [#allocation5], 0
      %s30 = sshll.u32 %s1, 4
      %s31 = int_to_ptr.hbm [resolvable:$true] %s30
      %s32 = sshll.u32 [#allocation4], 4
      %s33 = int_to_ptr.vmem [resolvable:$true] %s32
      %38 = dma.hbm_to_vmem [thread:$0]  %s31, 384, %s33, [#allocation5], 128, 128, 8
    $region9: #{tpu_custom_call.1} parent=1 // pred_fallthru
      _
    // Predicated region
    $region10: #{tpu_custom_call.1} parent=1 // pred_check
      _
    $region11: #{tpu_custom_call.1} parent=1 // pred_check_branch
      %40 = sbr.rel (0) target = $region13
    $region12: #{tpu_custom_call.1} parent=1 // pred_region
      %42 = vsyncadd [#allocation5], 0
      %s44 = sshll.u32 %s2, 4
      %s45 = int_to_ptr.hbm [resolvable:$true] %s44
      %s46 = sshll.u32 [#allocation6], 4
      %s47 = int_to_ptr.vmem [resolvable:$true] %s46
      %49 = dma.hbm_to_vmem [thread:$0]  %s45, 16, %s47, [#allocation5]
    $region13: #{tpu_custom_call.1} parent=1 // pred_fallthru
      _
    // Predicated region
    $region14: #{tpu_custom_call.1} parent=1 // pred_check
      _
    $region15: #{tpu_custom_call.1} parent=1 // pred_check_branch
      %51 = sbr.rel (0) target = $region17
    $region16: #{tpu_custom_call.1} parent=1 // pred_region
      %53 = vsyncadd [#allocation8], 0
      %s54 = sshll.u32 %s3, 4
      %s55 = int_to_ptr.hbm [resolvable:$true] %s54
      %s56 = sshll.u32 [#allocation7], 4
      %s57 = int_to_ptr.vmem [resolvable:$true] %s56
      %62 = dma.hbm_to_vmem [thread:$0]  %s55, 256, %s57, [#allocation8], 128, 128, 8
    $region17: #{tpu_custom_call.1} parent=1 // pred_fallthru
      _
    // Predicated region
    $region18: #{tpu_custom_call.1} parent=1 // pred_check
      _
    $region19: #{tpu_custom_call.1} parent=1 // pred_check_branch
      %64 = sbr.rel (0) target = $region21
    $region20: #{tpu_custom_call.1} parent=1 // pred_region
      %66 = vsyncadd [#allocation8], 0
      %s68 = sshll.u32 %s4, 4
      %s69 = int_to_ptr.hbm [resolvable:$true] %s68
      %s70 = sshll.u32 [#allocation9], 4
      %s71 = int_to_ptr.vmem [resolvable:$true] %s70
      %73 = dma.hbm_to_vmem [thread:$0]  %s69, 16, %s71, [#allocation8]
    $region21: #{tpu_custom_call.1} parent=1 // pred_fallthru
      _
    // Predicated region
    $region22: #{tpu_custom_call.1} parent=1 // pred_check
      _
    $region23: #{tpu_custom_call.1} parent=1 // pred_check_branch
      %75 = sbr.rel (0) target = $region25
    $region24: #{tpu_custom_call.1} parent=1 // pred_region
      _
    $region25: #{tpu_custom_call.1} parent=1 // pred_fallthru
      _
    // Predicated region
    $region26: #{tpu_custom_call.1} parent=1 // pred_check
      _
    $region27: #{tpu_custom_call.1} parent=1 // pred_check_branch
      %77 = sbr.rel (0) target = $region29
    $region28: #{tpu_custom_call.1} parent=1 // pred_region
      _
    $region29: #{tpu_custom_call.1} parent=1 // pred_fallthru
      _
    // Predicated region
    $region30: #{tpu_custom_call.1} parent=1 // pred_check
      _
    $region31: #{tpu_custom_call.1} parent=1 // pred_check_branch
      %79 = sbr.rel (0) target = $region33
    $region32: #{tpu_custom_call.1} parent=1 // pred_region
      %81 = dma.done [#allocation3], 128
    $region33: #{tpu_custom_call.1} parent=1 // pred_fallthru
      _
    // Predicated region
    $region34: #{tpu_custom_call.1} parent=1 // pred_check
      _
    $region35: #{tpu_custom_call.1} parent=1 // pred_check_branch
      %83 = sbr.rel (0) target = $region37
    $region36: #{tpu_custom_call.1} parent=1 // pred_region
      %85 = dma.done [#allocation5], 384
    $region37: #{tpu_custom_call.1} parent=1 // pred_fallthru
      _
    // Predicated region
    $region38: #{tpu_custom_call.1} parent=1 // pred_check
      _
    $region39: #{tpu_custom_call.1} parent=1 // pred_check_branch
      %87 = sbr.rel (0) target = $region41
    $region40: #{tpu_custom_call.1} parent=1 // pred_region
      %89 = dma.done [#allocation5], 16
    $region41: #{tpu_custom_call.1} parent=1 // pred_fallthru
      _
    // Predicated region
    $region42: #{tpu_custom_call.1} parent=1 // pred_check
      _
    $region43: #{tpu_custom_call.1} parent=1 // pred_check_branch
      %91 = sbr.rel (0) target = $region45
    $region44: #{tpu_custom_call.1} parent=1 // pred_region
      %93 = dma.done [#allocation8], 256
    $region45: #{tpu_custom_call.1} parent=1 // pred_fallthru
      _
    // Predicated region
    $region46: #{tpu_custom_call.1} parent=1 // pred_check
      _
    $region47: #{tpu_custom_call.1} parent=1 // pred_check_branch
      %95 = sbr.rel (0) target = $region49
    $region48: #{tpu_custom_call.1} parent=1 // pred_region
      %97 = dma.done [#allocation8], 16
    $region49: #{tpu_custom_call.1} parent=1 // pred_fallthru
      _
    %v98 = vld [vmem:[#allocation2] sm:$0xff]
    %v99 = vld [vmem:[#allocation4] sm:$0xff]
    %v100 = vld [vmem:[#allocation4 + $0x8] sm:$0xff]
    %v101 = vld [vmem:[#allocation4 + $0x10] sm:$0xf]
    %v102 = vld [vmem:[#allocation6] sm:$0x1]
    %v104 = vperm.slane %v102, 0
    %vm106 = vcmask 539648
    %v108 = vsel %vm106, %v98, 0
    %v111 = vsel %vm106, %v99, 0
    %v114 = vsel %vm106, %v100, 0
    %v117 = vsel %vm106, %v101, 0
    %119 = vmatpush.xpose.msra.mxu0 0.0
    %120 = vmatpush.xpose.msra.mxu0 0.0
    %121 = vmatpush.xpose.msra.mxu0 0.0
    %122 = vmatpush.xpose.msra.mxu0 0.0
    %123 = vmatpush.xpose.msra.mxu0 0.0
    %124 = vmatpush.xpose.msra.mxu0 0.0
    %125 = vmatpush.xpose.msra.mxu0 0.0
    %126 = vmatpush.xpose.msra.mxu0 0.0
    %127 = vmatpush.xpose.msra.mxu0 0.0
    %128 = vmatpush.xpose.msra.mxu0 0.0
    %129 = vmatpush.xpose.msra.mxu0 0.0
    %130 = vmatpush.xpose.msra.mxu0 0.0
    %131 = vmatpush.xpose.msra.mxu0 0.0
    %v132 = vand.u32 %v117, 4294901760
    %133 = vmatpush.xpose.msra.mxu0 %v132
    %v134 = vand.u32 %v114, 4294901760
    %135 = vmatpush.xpose.msra.mxu0 %v134
    %v136 = vand.u32 %v111, 4294901760
    %137 = vmatpush.xpose.msra.mxu0 %v136
    %v138 = vand.u32 %v108, 4294901760
    %v139 = vsub.f32 %v108, %v138
    %v140 = vand.u32 %v139, 4294901760
    %v141 = vsub.f32 %v139, %v140
    %v142 = vand.u32 %v141, 4294901760
    %143 = vmatmul.f32.gmra.mxu0 %v142
    %v144 = vpop.f32.mrf.mxu0
    %v145 = vadd.f32 %v104, %v144
    %146 = vdwg.mxu0
    %147 = vmatpush.xpose.msra.mxu0 0.0
    %148 = vmatpush.xpose.msra.mxu0 0.0
    %149 = vmatpush.xpose.msra.mxu0 0.0
    %150 = vmatpush.xpose.msra.mxu0 0.0
    %151 = vmatpush.xpose.msra.mxu0 0.0
    %152 = vmatpush.xpose.msra.mxu0 0.0
    %153 = vmatpush.xpose.msra.mxu0 0.0
    %154 = vmatpush.xpose.msra.mxu0 0.0
    %155 = vmatpush.xpose.msra.mxu0 0.0
    %156 = vmatpush.xpose.msra.mxu0 0.0
    %157 = vmatpush.xpose.msra.mxu0 0.0
    %158 = vmatpush.xpose.msra.mxu0 0.0
    %159 = vmatpush.xpose.msra.mxu0 0.0
    %v160 = vand.u32 %v117, 4294901760
    %v161 = vsub.f32 %v117, %v160
    %v162 = vand.u32 %v161, 4294901760
    %v163 = vsub.f32 %v161, %v162
    %v164 = vand.u32 %v163, 4294901760
    %165 = vmatpush.xpose.msra.mxu0 %v164
    %v166 = vand.u32 %v114, 4294901760
    %v167 = vsub.f32 %v114, %v166
    %v168 = vand.u32 %v167, 4294901760
    %v169 = vsub.f32 %v167, %v168
    %v170 = vand.u32 %v169, 4294901760
    %171 = vmatpush.xpose.msra.mxu0 %v170
    %v172 = vand.u32 %v111, 4294901760
    %v173 = vsub.f32 %v111, %v172
    %v174 = vand.u32 %v173, 4294901760
    %v175 = vsub.f32 %v173, %v174
    %v176 = vand.u32 %v175, 4294901760
    %177 = vmatpush.xpose.msra.mxu0 %v176
    %v178 = vand.u32 %v108, 4294901760
    %179 = vmatmul.f32.gmra.mxu0 %v178
    %v180 = vpop.f32.mrf.mxu0
    %v181 = vadd.f32 %v145, %v180
    %182 = vdwg.mxu0
    %183 = vmatpush.xpose.msra.mxu0 0.0
    %184 = vmatpush.xpose.msra.mxu0 0.0
    %185 = vmatpush.xpose.msra.mxu0 0.0
    %186 = vmatpush.xpose.msra.mxu0 0.0
    %187 = vmatpush.xpose.msra.mxu0 0.0
    %188 = vmatpush.xpose.msra.mxu0 0.0
    %189 = vmatpush.xpose.msra.mxu0 0.0
    %190 = vmatpush.xpose.msra.mxu0 0.0
    %191 = vmatpush.xpose.msra.mxu0 0.0
    %192 = vmatpush.xpose.msra.mxu0 0.0
    %193 = vmatpush.xpose.msra.mxu0 0.0
    %194 = vmatpush.xpose.msra.mxu0 0.0
    %195 = vmatpush.xpose.msra.mxu0 0.0
    %v196 = vand.u32 %v117, 4294901760
    %v197 = vsub.f32 %v117, %v196
    %198 = vmatpush.xpose.msra.mxu0 %v197
    %v199 = vand.u32 %v114, 4294901760
    %v200 = vsub.f32 %v114, %v199
    %201 = vmatpush.xpose.msra.mxu0 %v200
    %v202 = vand.u32 %v111, 4294901760
    %v203 = vsub.f32 %v111, %v202
    %204 = vmatpush.xpose.msra.mxu0 %v203
    %v205 = vand.u32 %v108, 4294901760
    %v206 = vsub.f32 %v108, %v205
    %207 = vmatmul.f32.gmra.mxu0 %v206
    %v208 = vpop.f32.mrf.mxu0
    %v209 = vadd.f32 %v181, %v208
    %210 = vdwg.mxu0
    %211 = vmatpush.xpose.msra.mxu0 0.0
    %212 = vmatpush.xpose.msra.mxu0 0.0
    %213 = vmatpush.xpose.msra.mxu0 0.0
    %214 = vmatpush.xpose.msra.mxu0 0.0
    %215 = vmatpush.xpose.msra.mxu0 0.0
    %216 = vmatpush.xpose.msra.mxu0 0.0
    %217 = vmatpush.xpose.msra.mxu0 0.0
    %218 = vmatpush.xpose.msra.mxu0 0.0
    %219 = vmatpush.xpose.msra.mxu0 0.0
    %220 = vmatpush.xpose.msra.mxu0 0.0
    %221 = vmatpush.xpose.msra.mxu0 0.0
    %222 = vmatpush.xpose.msra.mxu0 0.0
    %223 = vmatpush.xpose.msra.mxu0 0.0
    %v224 = vand.u32 %v117, 4294901760
    %225 = vmatpush.xpose.msra.mxu0 %v224
    %v226 = vand.u32 %v114, 4294901760
    %227 = vmatpush.xpose.msra.mxu0 %v226
    %v228 = vand.u32 %v111, 4294901760
    %229 = vmatpush.xpose.msra.mxu0 %v228
    %v230 = vand.u32 %v108, 4294901760
    %v231 = vsub.f32 %v108, %v230
    %v232 = vand.u32 %v231, 4294901760
    %233 = vmatmul.f32.gmra.mxu0 %v232
    %v234 = vpop.f32.mrf.mxu0
    %v235 = vadd.f32 %v209, %v234
    %236 = vdwg.mxu0
    %237 = vmatpush.xpose.msra.mxu0 0.0
    %238 = vmatpush.xpose.msra.mxu0 0.0
    %239 = vmatpush.xpose.msra.mxu0 0.0
    %240 = vmatpush.xpose.msra.mxu0 0.0
    %241 = vmatpush.xpose.msra.mxu0 0.0
    %242 = vmatpush.xpose.msra.mxu0 0.0
    %243 = vmatpush.xpose.msra.mxu0 0.0
    %244 = vmatpush.xpose.msra.mxu0 0.0
    %245 = vmatpush.xpose.msra.mxu0 0.0
    %246 = vmatpush.xpose.msra.mxu0 0.0
    %247 = vmatpush.xpose.msra.mxu0 0.0
    %248 = vmatpush.xpose.msra.mxu0 0.0
    %249 = vmatpush.xpose.msra.mxu0 0.0
    %v250 = vand.u32 %v117, 4294901760
    %v251 = vsub.f32 %v117, %v250
    %v252 = vand.u32 %v251, 4294901760
    %253 = vmatpush.xpose.msra.mxu0 %v252
    %v254 = vand.u32 %v114, 4294901760
    %v255 = vsub.f32 %v114, %v254
    %v256 = vand.u32 %v255, 4294901760
    %257 = vmatpush.xpose.msra.mxu0 %v256
    %v258 = vand.u32 %v111, 4294901760
    %v259 = vsub.f32 %v111, %v258
    %v260 = vand.u32 %v259, 4294901760
    %261 = vmatpush.xpose.msra.mxu0 %v260
    %v262 = vand.u32 %v108, 4294901760
    %263 = vmatmul.f32.gmra.mxu0 %v262
    %v264 = vpop.f32.mrf.mxu0
    %v265 = vadd.f32 %v235, %v264
    %266 = vdwg.mxu0
    %267 = vmatpush.xpose.msra.mxu0 0.0
    %268 = vmatpush.xpose.msra.mxu0 0.0
    %269 = vmatpush.xpose.msra.mxu0 0.0
    %270 = vmatpush.xpose.msra.mxu0 0.0
    %271 = vmatpush.xpose.msra.mxu0 0.0
    %272 = vmatpush.xpose.msra.mxu0 0.0
    %273 = vmatpush.xpose.msra.mxu0 0.0
    %274 = vmatpush.xpose.msra.mxu0 0.0
    %275 = vmatpush.xpose.msra.mxu0 0.0
    %276 = vmatpush.xpose.msra.mxu0 0.0
    %277 = vmatpush.xpose.msra.mxu0 0.0
    %278 = vmatpush.xpose.msra.mxu0 0.0
    %279 = vmatpush.xpose.msra.mxu0 0.0
    %v280 = vand.u32 %v117, 4294901760
    %281 = vmatpush.xpose.msra.mxu0 %v280
    %v282 = vand.u32 %v114, 4294901760
    %283 = vmatpush.xpose.msra.mxu0 %v282
    %v284 = vand.u32 %v111, 4294901760
    %285 = vmatpush.xpose.msra.mxu0 %v284
    %v286 = vand.u32 %v108, 4294901760
    %287 = vmatmul.f32.gmra.mxu0 %v286
    %v288 = vpop.f32.mrf.mxu0
    %v289 = vadd.f32 %v265, %v288
    %290 = vdwg.mxu0
    %v291 = vmax.f32 %v289, 0.0
    %v292 = vld [vmem:[#allocation7] sm:$0xff]
    %v293 = vld [vmem:[#allocation7 + $0x8] sm:$0x7f]
    %v294 = vld [vmem:[#allocation9] sm:$0x1]
    %v296 = vperm.slane %v294, 0
    %vm298 = vcmask 162816
    %v300 = vsel %vm298, %v291, 0
    %v303 = vsel %vm298, %v292, 0
    %v306 = vsel %vm298, %v293, 0
    %308 = vmatpush.xpose.msra.mxu0 0.0
    %309 = vmatpush.xpose.msra.mxu0 0.0
    %310 = vmatpush.xpose.msra.mxu0 0.0
    %311 = vmatpush.xpose.msra.mxu0 0.0
    %312 = vmatpush.xpose.msra.mxu0 0.0
    %313 = vmatpush.xpose.msra.mxu0 0.0
    %314 = vmatpush.xpose.msra.mxu0 0.0
    %315 = vmatpush.xpose.msra.mxu0 0.0
    %316 = vmatpush.xpose.msra.mxu0 0.0
    %317 = vmatpush.xpose.msra.mxu0 0.0
    %318 = vmatpush.xpose.msra.mxu0 0.0
    %319 = vmatpush.xpose.msra.mxu0 0.0
    %320 = vmatpush.xpose.msra.mxu0 0.0
    %321 = vmatpush.xpose.msra.mxu0 0.0
    %v322 = vand.u32 %v306, 4294901760
    %323 = vmatpush.xpose.msra.mxu0 %v322
    %v324 = vand.u32 %v303, 4294901760
    %325 = vmatpush.xpose.msra.mxu0 %v324
    %v326 = vand.u32 %v300, 4294901760
    %v327 = vsub.f32 %v300, %v326
    %v328 = vand.u32 %v327, 4294901760
    %v329 = vsub.f32 %v327, %v328
    %v330 = vand.u32 %v329, 4294901760
    %331 = vmatmul.f32.gmra.mxu0 %v330
    %v332 = vpop.f32.mrf.mxu0
    %v333 = vadd.f32 %v296, %v332
    %334 = vdwg.mxu0
    %335 = vmatpush.xpose.msra.mxu0 0.0
    %336 = vmatpush.xpose.msra.mxu0 0.0
    %337 = vmatpush.xpose.msra.mxu0 0.0
    %338 = vmatpush.xpose.msra.mxu0 0.0
    %339 = vmatpush.xpose.msra.mxu0 0.0
    %340 = vmatpush.xpose.msra.mxu0 0.0
    %341 = vmatpush.xpose.msra.mxu0 0.0
    %342 = vmatpush.xpose.msra.mxu0 0.0
    %343 = vmatpush.xpose.msra.mxu0 0.0
    %344 = vmatpush.xpose.msra.mxu0 0.0
    %345 = vmatpush.xpose.msra.mxu0 0.0
    %346 = vmatpush.xpose.msra.mxu0 0.0
    %347 = vmatpush.xpose.msra.mxu0 0.0
    %348 = vmatpush.xpose.msra.mxu0 0.0
    %v349 = vand.u32 %v306, 4294901760
    %v350 = vsub.f32 %v306, %v349
    %v351 = vand.u32 %v350, 4294901760
    %v352 = vsub.f32 %v350, %v351
    %v353 = vand.u32 %v352, 4294901760
    %354 = vmatpush.xpose.msra.mxu0 %v353
    %v355 = vand.u32 %v303, 4294901760
    %v356 = vsub.f32 %v303, %v355
    %v357 = vand.u32 %v356, 4294901760
    %v358 = vsub.f32 %v356, %v357
    %v359 = vand.u32 %v358, 4294901760
    %360 = vmatpush.xpose.msra.mxu0 %v359
    %v361 = vand.u32 %v300, 4294901760
    %362 = vmatmul.f32.gmra.mxu0 %v361
    %v363 = vpop.f32.mrf.mxu0
    %v364 = vadd.f32 %v333, %v363
    %365 = vdwg.mxu0
    %366 = vmatpush.xpose.msra.mxu0 0.0
    %367 = vmatpush.xpose.msra.mxu0 0.0
    %368 = vmatpush.xpose.msra.mxu0 0.0
    %369 = vmatpush.xpose.msra.mxu0 0.0
    %370 = vmatpush.xpose.msra.mxu0 0.0
    %371 = vmatpush.xpose.msra.mxu0 0.0
    %372 = vmatpush.xpose.msra.mxu0 0.0
    %373 = vmatpush.xpose.msra.mxu0 0.0
    %374 = vmatpush.xpose.msra.mxu0 0.0
    %375 = vmatpush.xpose.msra.mxu0 0.0
    %376 = vmatpush.xpose.msra.mxu0 0.0
    %377 = vmatpush.xpose.msra.mxu0 0.0
    %378 = vmatpush.xpose.msra.mxu0 0.0
    %379 = vmatpush.xpose.msra.mxu0 0.0
    %v380 = vand.u32 %v306, 4294901760
    %v381 = vsub.f32 %v306, %v380
    %382 = vmatpush.xpose.msra.mxu0 %v381
    %v383 = vand.u32 %v303, 4294901760
    %v384 = vsub.f32 %v303, %v383
    %385 = vmatpush.xpose.msra.mxu0 %v384
    %v386 = vand.u32 %v300, 4294901760
    %v387 = vsub.f32 %v300, %v386
    %388 = vmatmul.f32.gmra.mxu0 %v387
    %v389 = vpop.f32.mrf.mxu0
    %v390 = vadd.f32 %v364, %v389
    %391 = vdwg.mxu0
    %392 = vmatpush.xpose.msra.mxu0 0.0
    %393 = vmatpush.xpose.msra.mxu0 0.0
    %394 = vmatpush.xpose.msra.mxu0 0.0
    %395 = vmatpush.xpose.msra.mxu0 0.0
    %396 = vmatpush.xpose.msra.mxu0 0.0
    %397 = vmatpush.xpose.msra.mxu0 0.0
    %398 = vmatpush.xpose.msra.mxu0 0.0
    %399 = vmatpush.xpose.msra.mxu0 0.0
    %400 = vmatpush.xpose.msra.mxu0 0.0
    %401 = vmatpush.xpose.msra.mxu0 0.0
    %402 = vmatpush.xpose.msra.mxu0 0.0
    %403 = vmatpush.xpose.msra.mxu0 0.0
    %404 = vmatpush.xpose.msra.mxu0 0.0
    %405 = vmatpush.xpose.msra.mxu0 0.0
    %v406 = vand.u32 %v306, 4294901760
    %407 = vmatpush.xpose.msra.mxu0 %v406
    %v408 = vand.u32 %v303, 4294901760
    %409 = vmatpush.xpose.msra.mxu0 %v408
    %v410 = vand.u32 %v300, 4294901760
    %v411 = vsub.f32 %v300, %v410
    %v412 = vand.u32 %v411, 4294901760
    %413 = vmatmul.f32.gmra.mxu0 %v412
    %v414 = vpop.f32.mrf.mxu0
    %v415 = vadd.f32 %v390, %v414
    %416 = vdwg.mxu0
    %417 = vmatpush.xpose.msra.mxu0 0.0
    %418 = vmatpush.xpose.msra.mxu0 0.0
    %419 = vmatpush.xpose.msra.mxu0 0.0
    %420 = vmatpush.xpose.msra.mxu0 0.0
    %421 = vmatpush.xpose.msra.mxu0 0.0
    %422 = vmatpush.xpose.msra.mxu0 0.0
    %423 = vmatpush.xpose.msra.mxu0 0.0
    %424 = vmatpush.xpose.msra.mxu0 0.0
    %425 = vmatpush.xpose.msra.mxu0 0.0
    %426 = vmatpush.xpose.msra.mxu0 0.0
    %427 = vmatpush.xpose.msra.mxu0 0.0
    %428 = vmatpush.xpose.msra.mxu0 0.0
    %429 = vmatpush.xpose.msra.mxu0 0.0
    %430 = vmatpush.xpose.msra.mxu0 0.0
    %v431 = vand.u32 %v306, 4294901760
    %v432 = vsub.f32 %v306, %v431
    %v433 = vand.u32 %v432, 4294901760
    %434 = vmatpush.xpose.msra.mxu0 %v433
    %v435 = vand.u32 %v303, 4294901760
    %v436 = vsub.f32 %v303, %v435
    %v437 = vand.u32 %v436, 4294901760
    %438 = vmatpush.xpose.msra.mxu0 %v437
    %v439 = vand.u32 %v300, 4294901760
    %440 = vmatmul.f32.gmra.mxu0 %v439
    %v441 = vpop.f32.mrf.mxu0
    %v442 = vadd.f32 %v415, %v441
    %443 = vdwg.mxu0
    %444 = vmatpush.xpose.msra.mxu0 0.0
    %445 = vmatpush.xpose.msra.mxu0 0.0
    %446 = vmatpush.xpose.msra.mxu0 0.0
    %447 = vmatpush.xpose.msra.mxu0 0.0
    %448 = vmatpush.xpose.msra.mxu0 0.0
    %449 = vmatpush.xpose.msra.mxu0 0.0
    %450 = vmatpush.xpose.msra.mxu0 0.0
    %451 = vmatpush.xpose.msra.mxu0 0.0
    %452 = vmatpush.xpose.msra.mxu0 0.0
    %453 = vmatpush.xpose.msra.mxu0 0.0
    %454 = vmatpush.xpose.msra.mxu0 0.0
    %455 = vmatpush.xpose.msra.mxu0 0.0
    %456 = vmatpush.xpose.msra.mxu0 0.0
    %457 = vmatpush.xpose.msra.mxu0 0.0
    %v458 = vand.u32 %v306, 4294901760
    %459 = vmatpush.xpose.msra.mxu0 %v458
    %v460 = vand.u32 %v303, 4294901760
    %461 = vmatpush.xpose.msra.mxu0 %v460
    %v462 = vand.u32 %v300, 4294901760
    %463 = vmatmul.f32.gmra.mxu0 %v462
    %v464 = vpop.f32.mrf.mxu0
    %v465 = vadd.f32 %v442, %v464
    %466 = vdwg.mxu0
    %v467 = vmax.f32 %v465, 0.0
    %v468 = vld [vmem:[%s5] sm:$0xf]
    %v469 = vld [vmem:[%s6] sm:$0x1]
    %v471 = vperm.slane %v469, 0
    %vm473 = vcmask 121856
    %v475 = vsel %vm473, %v467, 0
    %v478 = vsel %vm473, %v468, 0
    %480 = vmatpush.xpose.msra.mxu0 0.0
    %481 = vmatpush.xpose.msra.mxu0 0.0
    %482 = vmatpush.xpose.msra.mxu0 0.0
    %483 = vmatpush.xpose.msra.mxu0 0.0
    %484 = vmatpush.xpose.msra.mxu0 0.0
    %485 = vmatpush.xpose.msra.mxu0 0.0
    %486 = vmatpush.xpose.msra.mxu0 0.0
    %487 = vmatpush.xpose.msra.mxu0 0.0
    %488 = vmatpush.xpose.msra.mxu0 0.0
    %489 = vmatpush.xpose.msra.mxu0 0.0
    %490 = vmatpush.xpose.msra.mxu0 0.0
    %491 = vmatpush.xpose.msra.mxu0 0.0
    %492 = vmatpush.xpose.msra.mxu0 0.0
    %493 = vmatpush.xpose.msra.mxu0 0.0
    %494 = vmatpush.xpose.msra.mxu0 0.0
    %v495 = vand.u32 %v478, 4294901760
    %496 = vmatpush.xpose.msra.mxu0 %v495
    %v497 = vand.u32 %v475, 4294901760
    %v498 = vsub.f32 %v475, %v497
    %v499 = vand.u32 %v498, 4294901760
    %v500 = vsub.f32 %v498, %v499
    %v501 = vand.u32 %v500, 4294901760
    %502 = vmatmul.f32.gmra.mxu0 %v501
    %v503 = vpop.f32.mrf.mxu0
    %v504 = vadd.f32 %v471, %v503
    %505 = vdwg.mxu0
    %506 = vmatpush.xpose.msra.mxu0 0.0
    %507 = vmatpush.xpose.msra.mxu0 0.0
    %508 = vmatpush.xpose.msra.mxu0 0.0
    %509 = vmatpush.xpose.msra.mxu0 0.0
    %510 = vmatpush.xpose.msra.mxu0 0.0
    %511 = vmatpush.xpose.msra.mxu0 0.0
    %512 = vmatpush.xpose.msra.mxu0 0.0
    %513 = vmatpush.xpose.msra.mxu0 0.0
    %514 = vmatpush.xpose.msra.mxu0 0.0
    %515 = vmatpush.xpose.msra.mxu0 0.0
    %516 = vmatpush.xpose.msra.mxu0 0.0
    %517 = vmatpush.xpose.msra.mxu0 0.0
    %518 = vmatpush.xpose.msra.mxu0 0.0
    %519 = vmatpush.xpose.msra.mxu0 0.0
    %520 = vmatpush.xpose.msra.mxu0 0.0
    %v521 = vand.u32 %v478, 4294901760
    %v522 = vsub.f32 %v478, %v521
    %v523 = vand.u32 %v522, 4294901760
    %v524 = vsub.f32 %v522, %v523
    %v525 = vand.u32 %v524, 4294901760
    %526 = vmatpush.xpose.msra.mxu0 %v525
    %v527 = vand.u32 %v475, 4294901760
    %528 = vmatmul.f32.gmra.mxu0 %v527
    %v529 = vpop.f32.mrf.mxu0
    %v530 = vadd.f32 %v504, %v529
    %531 = vdwg.mxu0
    %532 = vmatpush.xpose.msra.mxu0 0.0
    %533 = vmatpush.xpose.msra.mxu0 0.0
    %534 = vmatpush.xpose.msra.mxu0 0.0
    %535 = vmatpush.xpose.msra.mxu0 0.0
    %536 = vmatpush.xpose.msra.mxu0 0.0
    %537 = vmatpush.xpose.msra.mxu0 0.0
    %538 = vmatpush.xpose.msra.mxu0 0.0
    %539 = vmatpush.xpose.msra.mxu0 0.0
    %540 = vmatpush.xpose.msra.mxu0 0.0
    %541 = vmatpush.xpose.msra.mxu0 0.0
    %542 = vmatpush.xpose.msra.mxu0 0.0
    %543 = vmatpush.xpose.msra.mxu0 0.0
    %544 = vmatpush.xpose.msra.mxu0 0.0
    %545 = vmatpush.xpose.msra.mxu0 0.0
    %546 = vmatpush.xpose.msra.mxu0 0.0
    %v547 = vand.u32 %v478, 4294901760
    %v548 = vsub.f32 %v478, %v547
    %549 = vmatpush.xpose.msra.mxu0 %v548
    %v550 = vand.u32 %v475, 4294901760
    %v551 = vsub.f32 %v475, %v550
    %552 = vmatmul.f32.gmra.mxu0 %v551
    %v553 = vpop.f32.mrf.mxu0
    %v554 = vadd.f32 %v530, %v553
    %555 = vdwg.mxu0
    %556 = vmatpush.xpose.msra.mxu0 0.0
    %557 = vmatpush.xpose.msra.mxu0 0.0
    %558 = vmatpush.xpose.msra.mxu0 0.0
    %559 = vmatpush.xpose.msra.mxu0 0.0
    %560 = vmatpush.xpose.msra.mxu0 0.0
    %561 = vmatpush.xpose.msra.mxu0 0.0
    %562 = vmatpush.xpose.msra.mxu0 0.0
    %563 = vmatpush.xpose.msra.mxu0 0.0
    %564 = vmatpush.xpose.msra.mxu0 0.0
    %565 = vmatpush.xpose.msra.mxu0 0.0
    %566 = vmatpush.xpose.msra.mxu0 0.0
    %567 = vmatpush.xpose.msra.mxu0 0.0
    %568 = vmatpush.xpose.msra.mxu0 0.0
    %569 = vmatpush.xpose.msra.mxu0 0.0
    %570 = vmatpush.xpose.msra.mxu0 0.0
    %v571 = vand.u32 %v478, 4294901760
    %572 = vmatpush.xpose.msra.mxu0 %v571
    %v573 = vand.u32 %v475, 4294901760
    %v574 = vsub.f32 %v475, %v573
    %v575 = vand.u32 %v574, 4294901760
    %576 = vmatmul.f32.gmra.mxu0 %v575
    %v577 = vpop.f32.mrf.mxu0
    %v578 = vadd.f32 %v554, %v577
    %579 = vdwg.mxu0
    %580 = vmatpush.xpose.msra.mxu0 0.0
    %581 = vmatpush.xpose.msra.mxu0 0.0
    %582 = vmatpush.xpose.msra.mxu0 0.0
    %583 = vmatpush.xpose.msra.mxu0 0.0
    %584 = vmatpush.xpose.msra.mxu0 0.0
    %585 = vmatpush.xpose.msra.mxu0 0.0
    %586 = vmatpush.xpose.msra.mxu0 0.0
    %587 = vmatpush.xpose.msra.mxu0 0.0
    %588 = vmatpush.xpose.msra.mxu0 0.0
    %589 = vmatpush.xpose.msra.mxu0 0.0
    %590 = vmatpush.xpose.msra.mxu0 0.0
    %591 = vmatpush.xpose.msra.mxu0 0.0
    %592 = vmatpush.xpose.msra.mxu0 0.0
    %593 = vmatpush.xpose.msra.mxu0 0.0
    %594 = vmatpush.xpose.msra.mxu0 0.0
    %v595 = vand.u32 %v478, 4294901760
    %v596 = vsub.f32 %v478, %v595
    %v597 = vand.u32 %v596, 4294901760
    %598 = vmatpush.xpose.msra.mxu0 %v597
    %v599 = vand.u32 %v475, 4294901760
    %600 = vmatmul.f32.gmra.mxu0 %v599
    %v601 = vpop.f32.mrf.mxu0
    %v602 = vadd.f32 %v578, %v601
    %603 = vdwg.mxu0
    %604 = vmatpush.xpose.msra.mxu0 0.0
    %605 = vmatpush.xpose.msra.mxu0 0.0
    %606 = vmatpush.xpose.msra.mxu0 0.0
    %607 = vmatpush.xpose.msra.mxu0 0.0
    %608 = vmatpush.xpose.msra.mxu0 0.0
    %609 = vmatpush.xpose.msra.mxu0 0.0
    %610 = vmatpush.xpose.msra.mxu0 0.0
    %611 = vmatpush.xpose.msra.mxu0 0.0
    %612 = vmatpush.xpose.msra.mxu0 0.0
    %613 = vmatpush.xpose.msra.mxu0 0.0
    %614 = vmatpush.xpose.msra.mxu0 0.0
    %615 = vmatpush.xpose.msra.mxu0 0.0
    %616 = vmatpush.xpose.msra.mxu0 0.0
    %617 = vmatpush.xpose.msra.mxu0 0.0
    %618 = vmatpush.xpose.msra.mxu0 0.0
    %v619 = vand.u32 %v478, 4294901760
    %620 = vmatpush.xpose.msra.mxu0 %v619
    %v621 = vand.u32 %v475, 4294901760
    %622 = vmatmul.f32.gmra.mxu0 %v621
    %v623 = vpop.f32.mrf.mxu0
    %v624 = vadd.f32 %v602, %v623
    %625 = vdwg.mxu0
    %vm626 = vcmask 31744
    %627 = vst.msk [vmem:[%s7] sm:$0xff] %vm626, %v624
    // Predicated region
    $region50: #{tpu_custom_call.1} parent=1 // pred_check
      _
    $region51: #{tpu_custom_call.1} parent=1 // pred_check_branch
      %629 = sbr.rel (0) target = $region53
    $region52: #{tpu_custom_call.1} parent=1 // pred_region
      _
    $region53: #{tpu_custom_call.1} parent=1 // pred_fallthru
      _
    // Predicated region
    $region54: #{tpu_custom_call.1} parent=1 // pred_check
      _
    $region55: #{tpu_custom_call.1} parent=1 // pred_check_branch
      %631 = sbr.rel (0) target = $region57
    $region56: #{tpu_custom_call.1} parent=1 // pred_region
      _
    $region57: #{tpu_custom_call.1} parent=1 // pred_fallthru
      _
    %632 = vsyncpa [#allocation3], 1
    %633 = vsyncpa [#allocation5], 1
    %634 = vsyncpa [#allocation8], 1

</llo_original>
